<compile_context>
chip_gen: v7x
topology: tpu7x:2x2x1
jax: 0.10.0
libtpu: 0.0.40
codegen_flags: <defaults>
</compile_context>

<pallas_src>
import jax
import jax.numpy as jnp
from jax import lax
from jax.experimental import pallas as pl
from jax.experimental.pallas import tpu as pltpu


MXU_DTYPE = jnp.bfloat16   # matmul operand dtype (f32 accumulation inside the kernel)


# ----------------------------------------------------------------------------
# Pallas kernels
# ----------------------------------------------------------------------------
def _up_fused_kernel(cols_ref, w_ref, b_ref, emb_ref, o_ref):
    """Upsample branch: conv matmul + bias + (t + Linear(y)) emb, one lane tile.

    cols_ref : (CinK, TN)   bf16  im2col'd input, batch folded into lanes
    w_ref    : (Mpad, CinK) bf16  conv weight (rows padded to mult. of 8)
    b_ref    : (Mpad, 1)    f32   conv bias
    emb_ref  : (1, TN)      f32   t[n] + (y @ Wl.T + bl)[n, l] per output column
    o_ref    : (Mpad, TN)   f32
    """
    acc = jnp.dot(w_ref[...], cols_ref[...], preferred_element_type=jnp.float32)
    o_ref[...] = (acc + b_ref[...] + emb_ref[...]).astype(o_ref.dtype)


def _matmul_kernel(x_ref, w_ref, o_ref):
    """ConvTranspose branch hot path: Z = Wm @ Xf for one lane tile.

    x_ref : (Cin, TN)   bf16   input, batch folded into lanes
    w_ref : (Mpad, Cin) bf16   (Cout*K, Cin) weight, rows padded to mult. of 8
    o_ref : (Mpad, TN)  f32
    """
    o_ref[...] = jnp.dot(w_ref[...], x_ref[...],
                         preferred_element_type=jnp.float32).astype(o_ref.dtype)


# ----------------------------------------------------------------------------
# Glue helpers (plain JAX)
# ----------------------------------------------------------------------------
def _round_up(x, m):
    return (x + m - 1) // m * m


def _lane_tiling(ncols, max_tile=512):
    """Pick a lane tile (multiple of 128) and the padded column count."""
    tn = min(max_tile, _round_up(ncols, 128))
    return tn, _round_up(ncols, tn)


def _im2col(xpad, K, stride):
    """xpad: (N, C, Lp) -> cols: (N, C*K, Lout), cols[n, c*K+k, l] = xpad[n, c, l*stride+k]."""
    N, C, Lp = xpad.shape
    Lout = (Lp - K) // stride + 1
    taps = [xpad[:, :, k:k + stride * (Lout - 1) + 1:stride] for k in range(K)]
    cols = jnp.stack(taps, axis=2)            # (N, C, K, Lout)
    return cols.reshape(N, C * K, Lout), Lout


def _compiler_params():
    return pltpu.CompilerParams(dimension_semantics=("parallel",),
                                vmem_limit_bytes=32 * 1024 * 1024)


# ----------------------------------------------------------------------------
# Forward wrappers (mirror `up.forward`)
# ----------------------------------------------------------------------------
def up_forward_upsample(x, x_skip, t, y, params, *, kernel_size, stride, upsample):
    """upsample branch: cat -> Upsample(nearest) -> ConstantPad1d(k//2, 0) -> Conv1d -> + t + Linear(y)."""
    Wc, bc = params["conv_w"], params["conv_b"]          # (Cout, Cin, K), (Cout,)
    Wl, bl = params["lin_w"], params["lin_b"]            # (Lout, Ydim), (Lout,)
    N = x.shape[0]
    Cout = Wc.shape[0]
    Ydim = y.shape[-1]

    xc = jnp.concatenate([x, x_skip], axis=1)            # channel cat
    xu = jnp.repeat(xc, upsample, axis=-1)               # nearest-neighbor upsample
    pad = kernel_size // 2
    xp = jnp.pad(xu, ((0, 0), (0, 0), (pad, pad)))       # ConstantPad1d(value=0)

    # im2col (K x input inflation) kept as wrapper glue for lowering robustness.
    cols, Lout = _im2col(xp, kernel_size, stride)        # (N, CinK, Lout)
    CinK = cols.shape[1]

    # Fold batch into lanes: column index = n*Lout + l, padded to a 128-multiple.
    n_cols = N * Lout
    TN, Ncols = _lane_tiling(n_cols)
    colsf = jnp.transpose(cols, (1, 0, 2)).reshape(CinK, n_cols)
    colsf = jnp.pad(colsf, ((0, 0), (0, Ncols - n_cols))).astype(MXU_DTYPE)

    # Pad the M dim to a multiple of 8 so output stores are unmasked.
    Mpad = _round_up(Cout, 8)
    wmat = jnp.pad(Wc.reshape(Cout, CinK), ((0, Mpad - Cout), (0, 0))).astype(MXU_DTYPE)
    b2 = jnp.pad(bc.reshape(Cout, 1), ((0, Mpad - Cout), (0, 0))).astype(jnp.float32)

    # Tiny emb = t + y@Wl.T + bl precomputed once (O(N*Lout*Ydim)), lane-dense row.
    emb = t.reshape(N, 1) + y.reshape(N, Ydim) @ Wl.T + bl          # (N, Lout) f32
    embf = jnp.pad(emb.reshape(1, n_cols), ((0, 0), (0, Ncols - n_cols))).astype(jnp.float32)

    out2d = pl.pallas_call(
        _up_fused_kernel,
        out_shape=jax.ShapeDtypeStruct((Mpad, Ncols), jnp.float32),
        grid_spec=pltpu.PrefetchScalarGridSpec(
            num_scalar_prefetch=0,
            grid=(Ncols // TN,),
            in_specs=[
                pl.BlockSpec((CinK, TN), lambda j: (0, j)),
                pl.BlockSpec((Mpad, CinK), lambda j: (0, 0)),
                pl.BlockSpec((Mpad, 1), lambda j: (0, 0)),
                pl.BlockSpec((1, TN), lambda j: (0, j)),
            ],
            out_specs=pl.BlockSpec((Mpad, TN), lambda j: (0, j)),
        ),
        compiler_params=_compiler_params(),
    )(colsf, wmat, b2, embf)

    out = out2d[:Cout, :n_cols].reshape(Cout, N, Lout).transpose(1, 0, 2)
    return out.astype(x.dtype)


def up_forward_convtrans(x, params, *, kernel_size, stride, padding, output_padding):
    """else branch: ConvTranspose1d(x) = dense matmul (no structural zeros) + col2im scatter."""
    Wt, bt = params["convt_w"], params["convt_b"]        # (Cin, Cout, K), (Cout,)
    N, Cin, L = x.shape
    K = kernel_size
    Cout = Wt.shape[1]
    CoutK = Cout * K

    # Fold batch into lanes: Xf (Cin, N*L), padded lane-dense.
    n_cols = N * L
    TN, Ncols = _lane_tiling(n_cols)
    xf = jnp.transpose(x, (1, 0, 2)).reshape(Cin, n_cols)
    xf = jnp.pad(xf, ((0, 0), (0, Ncols - n_cols))).astype(MXU_DTYPE)

    # Weight matrix: rows (co, k), cols ci  ->  minimal-FLOP matmul (no dilation zeros).
    Mpad = _round_up(CoutK, 8)
    Wm = jnp.transpose(Wt, (1, 2, 0)).reshape(CoutK, Cin)
    Wm = jnp.pad(Wm, ((0, Mpad - CoutK), (0, 0))).astype(MXU_DTYPE)

    z2d = pl.pallas_call(
        _matmul_kernel,
        out_shape=jax.ShapeDtypeStruct((Mpad, Ncols), jnp.float32),
        grid_spec=pltpu.PrefetchScalarGridSpec(
            num_scalar_prefetch=0,
            grid=(Ncols // TN,),
            in_specs=[
                pl.BlockSpec((Cin, TN), lambda j: (0, j)),
                pl.BlockSpec((Mpad, Cin), lambda j: (0, 0)),
            ],
            out_specs=pl.BlockSpec((Mpad, TN), lambda j: (0, j)),
        ),
        compiler_params=_compiler_params(),
    )(xf, Wm)

    # col2im scatter-add (cheap, K strided updates in plain XLA):
    # out_full[n, co, i*stride + k] += z[n, co, k, i]
    z = z2d[:CoutK, :n_cols].reshape(Cout, K, N, L).transpose(2, 0, 1, 3)  # (N, Cout, K, L)
    Lfull = (L - 1) * stride + K
    out_full = jnp.zeros((N, Cout, Lfull), jnp.float32)
    for k in range(K):
        out_full = out_full.at[:, :, k:k + stride * (L - 1) + 1:stride].add(z[:, :, k, :])

    Lt = (L - 1) * stride - 2 * padding + K + output_padding
    need_right = padding + Lt - Lfull
    if need_right > 0:
        out_full = jnp.pad(out_full, ((0, 0), (0, 0), (0, need_right)))
    out = out_full[:, :, padding:padding + Lt] + bt[None, :, None]
    return out.astype(x.dtype)


# ----------------------------------------------------------------------------
# Pure-JAX references (correctness checking only)
# ----------------------------------------------------------------------------
def ref_upsample(x, x_skip, t, y, params, *, kernel_size, stride, upsample):
    Wc, bc, Wl, bl = params["conv_w"], params["conv_b"], params["lin_w"], params["lin_b"]
    xc = jnp.concatenate([x, x_skip], axis=1)
    xu = jnp.repeat(xc, upsample, axis=-1)
    pad = kernel_size // 2
    xp = jnp.pad(xu, ((0, 0), (0, 0), (pad, pad)))
    conv = lax.conv_general_dilated(xp, Wc, (stride,), "VALID",
                                    dimension_numbers=("NCH", "OIH", "NCH"))
    conv = conv + bc[None, :, None]
    N, Cout, Lout = conv.shape
    emb = jnp.broadcast_to(t[:, :, None], (N, Cout, Lout))   # t: (N, 1)
    y_shaped = y @ Wl.T + bl                                  # (N, 1, Lout)
    emb = emb + y_shaped
    return conv + emb


def ref_convtrans(x, params, *, kernel_size, stride, padding, output_padding):
    Wt, bt = params["convt_w"], params["convt_b"]
    K = kernel_size
    Wf = jnp.flip(jnp.transpose(Wt, (1, 0, 2)), axis=-1)
    lo = K - 1 - padding
    hi = K - 1 - padding + output_padding
    out = lax.conv_general_dilated(x, Wf, (1,), [(lo, hi)], lhs_dilation=(stride,),
                                   dimension_numbers=("NCH", "OIH", "NCH"))
    return out + bt[None, :, None]


# ----------------------------------------------------------------------------
if __name__ == "__main__":
    # TODO(synk): host-side `print('we are in up')` from the PyTorch forward is omitted.
    # TODO(synk): PyTorch builds nn.Linear(y.shape[-1], L_out) INSIDE forward (fresh random
    #             weights every call); here it is treated as a fixed parameter (lin_w/lin_b).
    key = jax.random.PRNGKey(0)

    N = 2
    in_channels = 8        # conv1d / convtranspose in_channels (= x channels + x_skip channels)
    out_channels = 4
    kernel_size = 5
    stride = 2
    padding = 11
    output_padding = 1
    upsample = 2
    L = 16
    y_dim = 8

    # conv output length of the upsample branch (needed for the Linear(y) weight shape)
    Lp = L * upsample + 2 * (kernel_size // 2)
    Lout = (Lp - kernel_size) // stride + 1

    ks = jax.random.split(key, 11)
    x = jax.random.normal(ks[0], (N, in_channels // 2, L), jnp.float32)
    x_skip = jax.random.normal(ks[1], (N, in_channels // 2, L), jnp.float32)
    t = jax.random.normal(ks[2], (N, 1), jnp.float32)          # time scalar per batch
    y = jax.random.normal(ks[3], (N, 1, y_dim), jnp.float32)   # conditioning

    params = {
        "conv_w": 0.1 * jax.random.normal(ks[4], (out_channels, in_channels, kernel_size), jnp.float32),
        "conv_b": 0.1 * jax.random.normal(ks[5], (out_channels,), jnp.float32),
        "lin_w": 0.1 * jax.random.normal(ks[6], (Lout, y_dim), jnp.float32),
        "lin_b": 0.1 * jax.random.normal(ks[7], (Lout,), jnp.float32),
        "convt_w": 0.1 * jax.random.normal(ks[8], (in_channels, out_channels, kernel_size), jnp.float32),
        "convt_b": 0.1 * jax.random.normal(ks[9], (out_channels,), jnp.float32),
    }

    # --- upsample branch (the `if self.upsample:` path) ---
    out_up = up_forward_upsample(x, x_skip, t, y, params,
                                 kernel_size=kernel_size, stride=stride, upsample=upsample)
    out_up = jax.block_until_ready(out_up)
    ref_up = ref_upsample(x, x_skip, t, y, params,
                          kernel_size=kernel_size, stride=stride, upsample=upsample)
    assert out_up.shape == (N, out_channels, Lout), out_up.shape
    assert jnp.allclose(out_up, ref_up, atol=5e-2, rtol=5e-2), "upsample branch mismatch"

    # --- else branch (ConvTranspose1d path) ---
    x_full = jax.random.normal(ks[10], (N, in_channels, L), jnp.float32)
    out_tr = up_forward_convtrans(x_full, params, kernel_size=kernel_size, stride=stride,
                                  padding=padding, output_padding=output_padding)
    out_tr = jax.block_until_ready(out_tr)
    ref_tr = ref_convtrans(x_full, params, kernel_size=kernel_size, stride=stride,
                           padding=padding, output_padding=output_padding)
    Lt_out = (L - 1) * stride - 2 * padding + kernel_size + output_padding
    assert out_tr.shape == (N, out_channels, Lt_out), out_tr.shape
    assert jnp.allclose(out_tr, ref_tr, atol=5e-2, rtol=5e-2), "convtranspose branch mismatch"

    print("KERNEL_OK")
</pallas_src>

<mosaic_0001>
module attributes {stable_mosaic.version = 11 : i64} {
  func.func @_up_fused_kernel(%arg0: i32, %arg1: memref<40x128xbf16, #tpu.memory_space<vmem>>, %arg2: memref<8x40xbf16, #tpu.memory_space<vmem>>, %arg3: memref<8x1xf32, #tpu.memory_space<vmem>>, %arg4: memref<1x128xf32, #tpu.memory_space<vmem>>, %arg5: memref<8x128xf32, #tpu.memory_space<vmem>>) attributes {dimension_semantics = [#tpu.dimension_semantics<parallel>], iteration_bounds = array<i64: 1>, scalar_prefetch = 0 : i64, scratch_operands = 0 : i64, tpu.core_type = #tpu.core_type<tc>, window_params = [{transform_indices = @transform_0, window_bounds = array<i64: 40, 128>}, {pipeline_mode = #tpu.pipeline_mode<synchronous>, transform_indices = @transform_1, window_bounds = array<i64: 8, 40>}, {pipeline_mode = #tpu.pipeline_mode<synchronous>, transform_indices = @transform_2, window_bounds = array<i64: 8, 1>}, {transform_indices = @transform_3, window_bounds = array<i64: 1, 128>}, {transform_indices = @transform_4, window_bounds = array<i64: 8, 128>}]} {
    %c0 = arith.constant 0 : index
    %c0_0 = arith.constant 0 : index
    %0 = vector.load %arg2[%c0, %c0_0] : memref<8x40xbf16, #tpu.memory_space<vmem>>, vector<8x40xbf16>
    %c0_1 = arith.constant 0 : index
    %c0_2 = arith.constant 0 : index
    %1 = vector.load %arg1[%c0_1, %c0_2] : memref<40x128xbf16, #tpu.memory_space<vmem>>, vector<40x128xbf16>
    %cst = arith.constant dense<0.000000e+00> : vector<8x128xf32>
    %2 = tpu.matmul %0, %1, %cst {dimension_numbers = #tpu.dot_dimension_numbers<[1], [0], [0], [1], [0, 0, 1, 1], [], []>} : vector<8x40xbf16>, vector<40x128xbf16>, vector<8x128xf32> -> vector<8x128xf32>
    %c0_3 = arith.constant 0 : index
    %c0_4 = arith.constant 0 : index
    %3 = vector.load %arg3[%c0_3, %c0_4] : memref<8x1xf32, #tpu.memory_space<vmem>>, vector<8x1xf32>
    %4 = vector.broadcast %3 : vector<8x1xf32> to vector<8x128xf32>
    %5 = arith.addf %2, %4 : vector<8x128xf32>
    %c0_5 = arith.constant 0 : index
    %c0_6 = arith.constant 0 : index
    %6 = vector.load %arg4[%c0_5, %c0_6] : memref<1x128xf32, #tpu.memory_space<vmem>>, vector<1x128xf32>
    %7 = vector.broadcast %6 : vector<1x128xf32> to vector<8x128xf32>
    %8 = arith.addf %5, %7 : vector<8x128xf32>
    %c0_7 = arith.constant 0 : index
    %c0_8 = arith.constant 0 : index
    %9 = vector.load %arg5[%c0_7, %c0_8] : memref<8x128xf32, #tpu.memory_space<vmem>>, vector<8x128xf32>
    tpu.vector_store %arg5[%c0_7, %c0_8], %8 {strides = array<i32>} : memref<8x128xf32, #tpu.memory_space<vmem>>, vector<8x128xf32>,
    return
  }
  func.func @transform_0(%arg0: i32) -> (i32, i32) {
    %c0_i32 = arith.constant 0 : i32
    %c0_i32_0 = arith.constant 0 : i32
    return %c0_i32, %arg0 : i32, i32
  }
  func.func @transform_1(%arg0: i32) -> (i32, i32) {
    %c0_i32 = arith.constant 0 : i32
    %c0_i32_0 = arith.constant 0 : i32
    %c0_i32_1 = arith.constant 0 : i32
    return %c0_i32, %c0_i32_0 : i32, i32
  }
  func.func @transform_2(%arg0: i32) -> (i32, i32) {
    %c0_i32 = arith.constant 0 : i32
    %c0_i32_0 = arith.constant 0 : i32
    %c0_i32_1 = arith.constant 0 : i32
    return %c0_i32, %c0_i32_0 : i32, i32
  }
  func.func @transform_3(%arg0: i32) -> (i32, i32) {
    %c0_i32 = arith.constant 0 : i32
    %c0_i32_0 = arith.constant 0 : i32
    return %c0_i32, %arg0 : i32, i32
  }
  func.func @transform_4(%arg0: i32) -> (i32, i32) {
    %c0_i32 = arith.constant 0 : i32
    %c0_i32_0 = arith.constant 0 : i32
    return %c0_i32, %arg0 : i32, i32
  }
}

</mosaic_0001>

<llo_original>
// kernel: tpu_custom_call.1
$region0: #{tpu_custom_call.1}
  #allocation0 [shape = 'u32[]', space=smem, size = 0x4, offset = 0x4, fixed_abs, tag = 'smem constant byte address 0x4 - core index']
  #allocation1 [shape = 'u32[144,128]{1,0:T(1,128)}', space=vmem, size = 0x12000, scoped, tag = 'internal scratch']
  %s0 = inlined_call_operand.hbm [shape: bf16[40,128], index: 0, kind: input, shape index: {}]
  %s1 = inlined_call_operand.vmem [shape: bf16[8,40], index: 1, kind: input, shape index: {}]
  %s2 = inlined_call_operand.vmem [shape: f32[8,1], index: 2, kind: input, shape index: {}]
  %s3 = inlined_call_operand.vmem [shape: f32[1,128], index: 3, kind: input, shape index: {}]
  %s4 = inlined_call_operand.hbm [shape: f32[8,128], index: 4, kind: output, shape index: {}]
  %s5 = sld [smem:[#allocation0]]
  $region30: #{tpu_custom_call.1} parent=0
    _
  %s7 = ssub.s32 1, %s5
  %s8 = scalar_select 0, %s7, %s5
  $region1: #{tpu_custom_call.1} parent=0
    #allocation2 [shape = 'u8[10240]{0}', space=vmem, size = 0x2800, scoped, tag = 'input window, operand 0, single buffered']
    #allocation3 [shape = 's32[1]{0}', space=sflag, size = 0x4, scoped, tag = 'scoped memory for tpu_custom_call.1']
    #allocation4 [shape = 's32[1]{0}', space=sflag, size = 0x4, scoped, tag = 'scoped memory for tpu_custom_call.1']
    #allocation5 [shape = 'u8[4096]{0}', space=vmem, size = 0x1000, scoped, tag = 'output window, operand 0, single buffered']
    %9 = vsyncpa [#allocation3], 0
    %10 = vsyncpa [#allocation4], 0
    // Predicated region
    $region2: #{tpu_custom_call.1} parent=1 // pred_check
      _
    $region3: #{tpu_custom_call.1} parent=1 // pred_check_branch
      %12 = sbr.rel (0) target = $region5
    $region4: #{tpu_custom_call.1} parent=1 // pred_region
      %s14 = ssub.s32 320, 320
      %15 = vsyncadd [#allocation3], %s14
      %s16 = sshll.u32 [#allocation2], 4
      %s17 = int_to_ptr.vmem [resolvable:$true] %s16
      %22 = dma.hbm_to_vmem [thread:$0]  %s0, 320, %s17, [#allocation3], 64, 64, 4
    $region5: #{tpu_custom_call.1} parent=1 // pred_fallthru
      _
    // Predicated region
    $region6: #{tpu_custom_call.1} parent=1 // pred_check
      _
    $region7: #{tpu_custom_call.1} parent=1 // pred_check_branch
      %24 = sbr.rel (0) target = $region9
    $region8: #{tpu_custom_call.1} parent=1 // pred_region
      _
    $region9: #{tpu_custom_call.1} parent=1 // pred_fallthru
      _
    // Predicated region
    $region10: #{tpu_custom_call.1} parent=1 // pred_check
      _
    $region11: #{tpu_custom_call.1} parent=1 // pred_check_branch
      %26 = sbr.rel (0) target = $region13
    $region12: #{tpu_custom_call.1} parent=1 // pred_region
      _
    $region13: #{tpu_custom_call.1} parent=1 // pred_fallthru
      _
    // Predicated region
    $region14: #{tpu_custom_call.1} parent=1 // pred_check
      _
    $region15: #{tpu_custom_call.1} parent=1 // pred_check_branch
      %28 = sbr.rel (0) target = $region17
    $region16: #{tpu_custom_call.1} parent=1 // pred_region
      _
    $region17: #{tpu_custom_call.1} parent=1 // pred_fallthru
      _
    // Predicated region
    $region18: #{tpu_custom_call.1} parent=1 // pred_check
      _
    $region19: #{tpu_custom_call.1} parent=1 // pred_check_branch
      %30 = sbr.rel (0) target = $region21
    $region20: #{tpu_custom_call.1} parent=1 // pred_region
      %31 = dma.done [#allocation3], 320
    $region21: #{tpu_custom_call.1} parent=1 // pred_fallthru
      _
    %v33 = vld [vmem:[%s1] sm:$0xf]
    %v34 = vld [vmem:[#allocation2] sm:$0xf]
    %v35 = vld [vmem:[#allocation2 + $0x4] sm:$0xf]
    %v36 = vld [vmem:[#allocation2 + $0x8] sm:$0xf]
    %v37 = vld [vmem:[#allocation2 + $0xc] sm:$0xf]
    %v38 = vld [vmem:[#allocation2 + $0x10] sm:$0xf]
    %v39 = vld [vmem:[%s2] sm:$0xff]
    %41 = vset.pattern.permute.xlu0 0
    %42 = vperm.xlu0 %41, %v39
    %v43 = vpop.permute.xlu0 %42
    %v50 = vunpack.c.l.b16 %v34
    %v51 = vunpack.c.l.b16 %v35
    %v52 = vunpack.c.l.b16 %v36
    %v53 = vunpack.c.l.b16 %v37
    %v54 = vunpack.c.l.b16 %v38
    %v55 = vpack.c.b16 %v51, %v50
    %v56 = vpack.c.b16 %v53, %v52
    %v57 = vpack.c.b16 %v54, %v54
    %vm60 = vcmask 326656
    %v62 = vsel %vm60, %v33, 0
    %vm64 = vcmask 1043456
    %v66 = vsel %vm64, %v57, 0
    %68 = vmatprep.subr.bf16.mxu0 0
    %69 = vmatpush1.bf16.msra.mxu0 %v55
    %70 = vmatprep.subr.bf16.mxu0 0
    %71 = vmatpush1.bf16.msra.mxu0 %v56
    %72 = vmatprep.subr.bf16.mxu0 0
    %73 = vmatpush1.bf16.msra.mxu0 %v66
    %74 = vmatprep.subr.bf16.mxu0 0
    %75 = vmatpush1.bf16.msra.mxu0 0
    %76 = vmatprep.subr.bf16.mxu0 0
    %77 = vmatpush1.bf16.msra.mxu0 0
    %78 = vmatprep.subr.bf16.mxu0 0
    %79 = vmatpush1.bf16.msra.mxu0 0
    %80 = vmatprep.subr.bf16.mxu0 0
    %81 = vmatpush1.bf16.msra.mxu0 0
    %82 = vmatprep.subr.bf16.mxu0 0
    %83 = vmatpush1.bf16.msra.mxu0 0
    %84 = vmatprep.subr.bf16.mxu0 0
    %85 = vmatpush1.bf16.msra.mxu0 0
    %86 = vmatprep.subr.bf16.mxu0 0
    %87 = vmatpush1.bf16.msra.mxu0 0
    %88 = vmatprep.subr.bf16.mxu0 0
    %89 = vmatpush1.bf16.msra.mxu0 0
    %90 = vmatprep.subr.bf16.mxu0 0
    %91 = vmatpush1.bf16.msra.mxu0 0
    %92 = vmatprep.subr.bf16.mxu0 0
    %93 = vmatpush1.bf16.msra.mxu0 0
    %94 = vmatprep.subr.bf16.mxu0 0
    %95 = vmatpush1.bf16.msra.mxu0 0
    %96 = vmatprep.subr.bf16.mxu0 0
    %97 = vmatpush1.bf16.msra.mxu0 0
    %98 = vmatprep.subr.bf16.mxu0 0
    %99 = vmatpush1.bf16.msra.mxu0 0
    %100 = vmatprep.mubr.bf16.mxu0 0
    %101 = vmatmul.mubr.bf16.gmra.mrb[0].mxu0 %v62
    %v102 = vpop.f32.mrb[0].mxu0
    %v103 = vadd.f32 %v43, %v102
    %v104 = vpop.f32.mrb[0].mxu0
    %v105 = vpop.f32.mrb[0].mxu0
    %v106 = vpop.f32.mrb[0].mxu0
    %107 = vdwg.mxu0
    %v108 = vld [vmem:[%s3] sm:$0x1]
    %v110 = vlaneseq
    %v111 = vshrl.u32 %v110, 7
    %v112 = vsub.s32 0, %v111
    %v113 = vrot.slane %v108, %v112
    %v115 = vadd.f32 %v103, %v113
    %116 = vst [vmem:[#allocation5] sm:$0xff] %v115
    // Predicated region
    $region22: #{tpu_custom_call.1} parent=1 // pred_check
      _
    $region23: #{tpu_custom_call.1} parent=1 // pred_check_branch
      %118 = sbr.rel (0) target = $region25
    $region24: #{tpu_custom_call.1} parent=1 // pred_region
      %s120 = ssub.s32 128, 128
      %121 = vsyncadd [#allocation4], %s120
      %s123 = sshll.u32 [#allocation5], 4
      %s124 = int_to_ptr.vmem [resolvable:$true] %s123
      %126 = dma.vmem_to_hbm [thread:$0]  %s124, 128, %s4, [#allocation4]
    $region25: #{tpu_custom_call.1} parent=1 // pred_fallthru
      _
    // Predicated region
    $region26: #{tpu_custom_call.1} parent=1 // pred_check
      _
    $region27: #{tpu_custom_call.1} parent=1 // pred_check_branch
      %128 = sbr.rel (0) target = $region29
    $region28: #{tpu_custom_call.1} parent=1 // pred_region
      %129 = dma.done [#allocation4], 128
    $region29: #{tpu_custom_call.1} parent=1 // pred_fallthru
      _
    %130 = vsyncpa [#allocation3], 1
    %131 = vsyncpa [#allocation4], 1

</llo_original>
